<compile_context>
chip_gen: v6e
topology: v6e:2x2x1
jax: 0.10.0
libtpu: 0.0.40
codegen_flags: <defaults>
</compile_context>

<pallas_src>
import math
import functools

import jax
import jax.numpy as jnp
from jax import lax
from jax.experimental import pallas as pl
from jax.experimental.pallas import tpu as pltpu


# --------------------------------------------------------------------------------------
# Shared compute: complex matmul of planar tiles as 4 real MXU dots (f32 accumulation).
# --------------------------------------------------------------------------------------
def _complex_dots(hr_ref, hi_ref, wnr, wni, or_ref, oi_ref):
    hr = hr_ref[...].astype(wnr.dtype)
    hi = hi_ref[...].astype(wnr.dtype)
    rr = jnp.dot(hr, wnr, preferred_element_type=jnp.float32)
    ii = jnp.dot(hi, wni, preferred_element_type=jnp.float32)
    ri = jnp.dot(hr, wni, preferred_element_type=jnp.float32)
    ir = jnp.dot(hi, wnr, preferred_element_type=jnp.float32)
    or_ref[...] = (rr - ii).astype(or_ref.dtype)
    oi_ref[...] = (ri + ir).astype(oi_ref.dtype)


# --------------------------------------------------------------------------------------
# Fully fused forward kernel: normalize the raw codebook tile into VMEM scratch once per
# codebook tile (first batch step), then the 4-dot complex matmul.
# Grid = (N_tiles [outer], M_tiles [inner]).
# --------------------------------------------------------------------------------------
def _fused_forward_kernel(hr_ref, hi_ref, wr_ref, wi_ref, or_ref, oi_ref,
                          wnr_scr, wni_scr, *, inv_scale):
    @pl.when(pl.program_id(1) == 0)          # first batch tile for this codebook tile
    def _():
        wr = wr_ref[...].astype(jnp.float32)
        wi = wi_ref[...].astype(jnp.float32)
        # Phase-only normalization: W / |W| / sqrt(num_antenna).
        # NOTE: an exactly-zero entry yields inf/NaN, identical to the PyTorch reference.
        inv_mag = lax.rsqrt(wr * wr + wi * wi) * inv_scale
        wnr_scr[...] = (wr * inv_mag).astype(wnr_scr.dtype)
        wni_scr[...] = (wi * inv_mag).astype(wni_scr.dtype)
    _complex_dots(hr_ref, hi_ref, wnr_scr[...], wni_scr[...], or_ref, oi_ref)


# Apply kernel for a pre-normalized (cached) codebook: no normalization, no scratch.
def _apply_kernel(hr_ref, hi_ref, wr_ref, wi_ref, or_ref, oi_ref):
    _complex_dots(hr_ref, hi_ref, wr_ref[...], wi_ref[...], or_ref, oi_ref)


# One-shot codebook normalization kernel (prepare()), tiled over N for huge codebooks.
def _prepare_kernel(wr_ref, wi_ref, wnr_ref, wni_ref, *, inv_scale):
    wr = wr_ref[...].astype(jnp.float32)
    wi = wi_ref[...].astype(jnp.float32)
    inv_mag = lax.rsqrt(wr * wr + wi * wi) * inv_scale
    wnr_ref[...] = (wr * inv_mag).astype(wnr_ref.dtype)
    wni_ref[...] = (wi * inv_mag).astype(wni_ref.dtype)


# --------------------------------------------------------------------------------------
# Tiling helpers.
# --------------------------------------------------------------------------------------
def _round_up(x, m):
    return -(-x // m) * m


def _pick_tm(M, granule, cap=256):
    """Batch tile: full batch if small, else the largest divisor of the granule-padded
    batch that is a multiple of `granule` and <= cap. Returns (tm, padded_M)."""
    if M <= cap:
        return M, M
    Mp = _round_up(M, granule)
    tm = cap - cap % granule
    while Mp % tm:
        tm -= granule
    return tm, Mp


def _pick_tn(N, per_col_bytes, budget_bytes=8 << 20):
    """Codebook tile (lanes): full N if it fits the VMEM budget, else the largest
    128-multiple divisor of N under budget (fits default scoped VMEM on v5e/v6e/v7x)."""
    tn_cap = max(128, (budget_bytes // max(per_col_bytes, 1)) // 128 * 128)
    if N <= tn_cap:
        return N
    tn = tn_cap
    while tn >= 128:
        if N % tn == 0:
            return tn
        tn -= 128
    return N   # N has no 128-multiple divisor under budget; keep resident (raise vmem limit)


# --------------------------------------------------------------------------------------
# Single pallas_call builder shared by the fused forward and the cached-codebook apply.
# --------------------------------------------------------------------------------------
def _run_complex_matmul(h_real, h_imag, w_real, w_imag, *, mm_dtype, normalize,
                        inv_scale=None, tm=None, tn=None, out_dtype=jnp.float32,
                        vmem_limit_bytes=None):
    M, K = h_real.shape
    Kw, N = w_real.shape
    assert K == Kw, "h and W antenna dims must match"
    mm_dtype = jnp.dtype(mm_dtype)
    itemsize = mm_dtype.itemsize
    granule = 16 if mm_dtype == jnp.dtype(jnp.bfloat16) else 8   # bf16 sublane packing = 16

    if tm is None:
        tm, Mp = _pick_tm(M, granule)
    else:
        assert tm == M or tm % granule == 0, f"tm must equal M or be a multiple of {granule}"
        Mp = _round_up(M, tm)
    if Mp != M:   # zero-pad odd batch sizes; sliced off below
        pad = ((0, Mp - M), (0, 0))
        h_real = jnp.pad(h_real, pad)
        h_imag = jnp.pad(h_imag, pad)

    w_in_itemsize = 4 if normalize else itemsize
    if tn is None:
        per_col = K * (4 * w_in_itemsize + (2 * itemsize if normalize else 0))
        tn = _pick_tn(N, per_col)
    else:
        assert tn == N or (N % tn == 0 and tn % 128 == 0), \
            "tn must divide N and be a multiple of 128 (or equal N)"

    grid = (N // tn, Mp // tm)        # codebook axis OUTER -> each codebook tile DMA'd once
    h_spec = pl.BlockSpec((tm, K), lambda j, i: (i, 0))
    w_spec = pl.BlockSpec((K, tn), lambda j, i: (0, j))
    o_spec = pl.BlockSpec((tm, tn), lambda j, i: (i, j))

    if normalize:
        kernel = functools.partial(_fused_forward_kernel, inv_scale=inv_scale)
        scratch_shapes = [pltpu.VMEM((K, tn), mm_dtype), pltpu.VMEM((K, tn), mm_dtype)]
        # Batch axis must stay sequential within a codebook tile (scratch written at i == 0).
        dims = ("parallel", "arbitrary")
        extra_flops, extra_trans = 6 * K * N, K * N
    else:
        kernel = _apply_kernel
        scratch_shapes = []
        dims = ("parallel", "parallel")
        extra_flops, extra_trans = 0, 0

    out_itemsize = jnp.dtype(out_dtype).itemsize
    cost = pl.CostEstimate(
        flops=8 * Mp * K * N + extra_flops,
        transcendentals=extra_trans,
        bytes_accessed=(grid[0] * 2 * Mp * K * h_real.dtype.itemsize   # h re-streamed per W tile
                        + 2 * K * N * w_in_itemsize                    # codebook read once
                        + 2 * Mp * N * out_itemsize),                  # planar outputs
    )
    cp_kwargs = dict(dimension_semantics=dims)
    if vmem_limit_bytes is not None:
        cp_kwargs["vmem_limit_bytes"] = vmem_limit_bytes

    out_r, out_i = pl.pallas_call(
        kernel,
        out_shape=(jax.ShapeDtypeStruct((Mp, N), out_dtype),
                   jax.ShapeDtypeStruct((Mp, N), out_dtype)),
        grid_spec=pltpu.PrefetchScalarGridSpec(
            num_scalar_prefetch=0,
            grid=grid,
            in_specs=[h_spec, h_spec, w_spec, w_spec],
            out_specs=[o_spec, o_spec],
            scratch_shapes=scratch_shapes),
        compiler_params=pltpu.CompilerParams(**cp_kwargs),
        cost_estimate=cost,
    )(h_real, h_imag, w_real, w_imag)

    if Mp != M:
        out_r, out_i = out_r[:M], out_i[:M]
    return out_r, out_i


# --------------------------------------------------------------------------------------
# Public API.
# --------------------------------------------------------------------------------------
def phase_shifter_prepare(w_real, w_imag, *, use_bf16=True, tn=None):
    """One-shot codebook normalization (== get_W()), returned as planar (K, N) arrays in
    the matmul dtype. Cache the result when W is static and feed phase_shifter_apply."""
    K, N = w_real.shape
    mm_dtype = jnp.bfloat16 if use_bf16 else jnp.float32
    itemsize = jnp.dtype(mm_dtype).itemsize
    if tn is None:
        tn = _pick_tn(N, K * (16 + 4 * itemsize))
    else:
        assert tn == N or (N % tn == 0 and tn % 128 == 0)
    kernel = functools.partial(_prepare_kernel, inv_scale=1.0 / math.sqrt(float(K)))
    wnr, wni = pl.pallas_call(
        kernel,
        out_shape=(jax.ShapeDtypeStruct((K, N), mm_dtype),
                   jax.ShapeDtypeStruct((K, N), mm_dtype)),
        grid_spec=pltpu.PrefetchScalarGridSpec(
            num_scalar_prefetch=0,
            grid=(N // tn,),
            in_specs=[pl.BlockSpec((K, tn), lambda j: (0, j)),
                      pl.BlockSpec((K, tn), lambda j: (0, j))],
            out_specs=[pl.BlockSpec((K, tn), lambda j: (0, j)),
                       pl.BlockSpec((K, tn), lambda j: (0, j))]),
        compiler_params=pltpu.CompilerParams(dimension_semantics=("parallel",)),
        cost_estimate=pl.CostEstimate(flops=7 * K * N, transcendentals=K * N,
                                      bytes_accessed=2 * K * N * (4 + itemsize)),
    )(w_real.astype(jnp.float32), w_imag.astype(jnp.float32))
    return wnr, wni


def phase_shifter_apply_planar(h_real, h_imag, wn_real, wn_imag, **kwargs):
    """Forward with a cached / pre-normalized codebook (from phase_shifter_prepare)."""
    return _run_complex_matmul(h_real, h_imag, wn_real, wn_imag,
                               mm_dtype=wn_real.dtype, normalize=False, **kwargs)


def phase_shifter_forward_planar(h_real, h_imag, w_real, w_imag, *, use_bf16=True, **kwargs):
    """Fully fused forward from raw parameters: normalization + complex matmul in ONE
    pallas_call, planar in / planar out (no wrapper concat/cast/slice passes)."""
    K = w_real.shape[0]
    mm_dtype = jnp.bfloat16 if use_bf16 else jnp.float32
    return _run_complex_matmul(h_real, h_imag,
                               w_real.astype(jnp.float32), w_imag.astype(jnp.float32),
                               mm_dtype=mm_dtype, normalize=True,
                               inv_scale=1.0 / math.sqrt(float(K)), **kwargs)


def phase_shifter_forward(h, w_real, w_imag, **kwargs):
    """Complex-input convenience wrapper matching the PyTorch module's forward."""
    out_r, out_i = phase_shifter_forward_planar(
        jnp.real(h).astype(jnp.float32), jnp.imag(h).astype(jnp.float32),
        w_real, w_imag, **kwargs)
    return lax.complex(out_r, out_i)


def init_phase_shifter_params(key, num_antenna, num_beam):
    """kaiming_uniform_(a=sqrt(5)) equivalent: U(-b, b), b = 1/sqrt(fan_in);
    PyTorch fan_in of a (num_antenna, num_beam) 2-D tensor is num_beam."""
    k_r, k_i = jax.random.split(key)
    bound = 1.0 / math.sqrt(num_beam)
    w_real = jax.random.uniform(k_r, (num_antenna, num_beam), jnp.float32, -bound, bound)
    w_imag = jax.random.uniform(k_i, (num_antenna, num_beam), jnp.float32, -bound, bound)
    return w_real, w_imag


if __name__ == "__main__":
    key = jax.random.PRNGKey(0)
    k_p, k_hr, k_hi = jax.random.split(key, 3)

    batch = 16          # M
    num_antenna = 64    # K
    num_beam = 128      # N

    w_real, w_imag = init_phase_shifter_params(k_p, num_antenna, num_beam)
    h_real = jax.random.normal(k_hr, (batch, num_antenna), jnp.float32)
    h_imag = jax.random.normal(k_hi, (batch, num_antenna), jnp.float32)

    # Pure-JAX reference.
    h = lax.complex(h_real, h_imag)
    W = lax.complex(w_real, w_imag)
    W_norm = W / jnp.abs(W) / jnp.sqrt(jnp.float32(num_antenna))
    ref = h @ W_norm

    # 1) Fully fused single-kernel forward, bf16 MXU path.
    out_r, out_i = jax.block_until_ready(
        phase_shifter_forward_planar(h_real, h_imag, w_real, w_imag, use_bf16=True))
    assert out_r.shape == (batch, num_beam) and out_i.shape == (batch, num_beam)
    err_bf16 = jnp.maximum(jnp.max(jnp.abs(out_r - jnp.real(ref))),
                           jnp.max(jnp.abs(out_i - jnp.imag(ref))))
    assert float(err_bf16) < 1e-1, f"fused bf16 path max abs err {float(err_bf16)}"

    # 2) prepare()/apply() split: normalization runs once, codebook cached in f32.
    wn_real, wn_imag = phase_shifter_prepare(w_real, w_imag, use_bf16=False)
    a_r, a_i = jax.block_until_ready(
        phase_shifter_apply_planar(h_real, h_imag, wn_real, wn_imag))
    err_f32 = jnp.maximum(jnp.max(jnp.abs(a_r - jnp.real(ref))),
                          jnp.max(jnp.abs(a_i - jnp.imag(ref))))
    assert float(err_f32) < 2e-2, f"cached f32 path max abs err {float(err_f32)}"

    # 3) Complex-input wrapper (matches the PyTorch forward signature), f32 fused path.
    out_c = jax.block_until_ready(phase_shifter_forward(h, w_real, w_imag, use_bf16=False))
    assert out_c.shape == (batch, num_beam) and out_c.dtype == jnp.complex64
    err_c = jnp.max(jnp.abs(out_c - ref))
    assert float(err_c) < 2e-2, f"complex wrapper max abs err {float(err_c)}"

    print("KERNEL_OK")
</pallas_src>

<mosaic_0001>
module attributes {stable_mosaic.version = 11 : i64} {
  func.func @_fused_forward_kernel(%arg0: i32, %arg1: i32, %arg2: memref<16x64xf32, #tpu.memory_space<vmem>>, %arg3: memref<16x64xf32, #tpu.memory_space<vmem>>, %arg4: memref<64x128xf32, #tpu.memory_space<vmem>>, %arg5: memref<64x128xf32, #tpu.memory_space<vmem>>, %arg6: memref<16x128xf32, #tpu.memory_space<vmem>>, %arg7: memref<16x128xf32, #tpu.memory_space<vmem>>, %arg8: memref<64x128xbf16, #tpu.memory_space<vmem>>, %arg9: memref<64x128xbf16, #tpu.memory_space<vmem>>) attributes {dimension_semantics = [#tpu.dimension_semantics<parallel>, #tpu.dimension_semantics<arbitrary>], iteration_bounds = array<i64: 1, 1>, scalar_prefetch = 0 : i64, scratch_operands = 2 : i64, tpu.core_type = #tpu.core_type<tc>, window_params = [{transform_indices = @transform_0, window_bounds = array<i64: 16, 64>}, {transform_indices = @transform_1, window_bounds = array<i64: 16, 64>}, {transform_indices = @transform_2, window_bounds = array<i64: 64, 128>}, {transform_indices = @transform_3, window_bounds = array<i64: 64, 128>}, {transform_indices = @transform_4, window_bounds = array<i64: 16, 128>}, {transform_indices = @transform_5, window_bounds = array<i64: 16, 128>}]} {
    %c0_i32 = arith.constant 0 : i32
    %0 = arith.cmpi eq, %arg1, %c0_i32 : i32
    %1 = arith.extui %0 : i1 to i32
    %c0_i32_0 = arith.constant 0 : i32
    %2 = arith.cmpi ne, %1, %c0_i32_0 : i32
    scf.if %2 {
      %c0_15 = arith.constant 0 : index
      %c0_16 = arith.constant 0 : index
      %17 = vector.load %arg4[%c0_15, %c0_16] : memref<64x128xf32, #tpu.memory_space<vmem>>, vector<64x128xf32>
      %c0_17 = arith.constant 0 : index
      %c0_18 = arith.constant 0 : index
      %18 = vector.load %arg5[%c0_17, %c0_18] : memref<64x128xf32, #tpu.memory_space<vmem>>, vector<64x128xf32>
      %19 = arith.mulf %17, %17 : vector<64x128xf32>
      %20 = arith.mulf %18, %18 : vector<64x128xf32>
      %21 = arith.addf %19, %20 : vector<64x128xf32>
      %22 = math.rsqrt %21 : vector<64x128xf32>
      %cst_19 = arith.constant 1.250000e-01 : f32
      %23 = vector.broadcast %cst_19 : f32 to vector<64x128xf32>
      %24 = arith.mulf %22, %23 : vector<64x128xf32>
      %25 = arith.mulf %17, %24 : vector<64x128xf32>
      %26 = arith.truncf %25 : vector<64x128xf32> to vector<64x128xbf16>
      %c0_20 = arith.constant 0 : index
      %c0_21 = arith.constant 0 : index
      %27 = vector.load %arg8[%c0_20, %c0_21] : memref<64x128xbf16, #tpu.memory_space<vmem>>, vector<64x128xbf16>
      tpu.vector_store %arg8[%c0_20, %c0_21], %26 {strides = array<i32>} : memref<64x128xbf16, #tpu.memory_space<vmem>>, vector<64x128xbf16>,
      %28 = arith.mulf %18, %24 : vector<64x128xf32>
      %29 = arith.truncf %28 : vector<64x128xf32> to vector<64x128xbf16>
      %c0_22 = arith.constant 0 : index
      %c0_23 = arith.constant 0 : index
      %30 = vector.load %arg9[%c0_22, %c0_23] : memref<64x128xbf16, #tpu.memory_space<vmem>>, vector<64x128xbf16>
      tpu.vector_store %arg9[%c0_22, %c0_23], %29 {strides = array<i32>} : memref<64x128xbf16, #tpu.memory_space<vmem>>, vector<64x128xbf16>,
    } else {
    }
    %c0 = arith.constant 0 : index
    %c0_1 = arith.constant 0 : index
    %3 = vector.load %arg8[%c0, %c0_1] : memref<64x128xbf16, #tpu.memory_space<vmem>>, vector<64x128xbf16>
    %c0_2 = arith.constant 0 : index
    %c0_3 = arith.constant 0 : index
    %4 = vector.load %arg9[%c0_2, %c0_3] : memref<64x128xbf16, #tpu.memory_space<vmem>>, vector<64x128xbf16>
    %c0_4 = arith.constant 0 : index
    %c0_5 = arith.constant 0 : index
    %5 = vector.load %arg2[%c0_4, %c0_5] : memref<16x64xf32, #tpu.memory_space<vmem>>, vector<16x64xf32>
    %6 = arith.truncf %5 : vector<16x64xf32> to vector<16x64xbf16>
    %c0_6 = arith.constant 0 : index
    %c0_7 = arith.constant 0 : index
    %7 = vector.load %arg3[%c0_6, %c0_7] : memref<16x64xf32, #tpu.memory_space<vmem>>, vector<16x64xf32>
    %8 = arith.truncf %7 : vector<16x64xf32> to vector<16x64xbf16>
    %cst = arith.constant dense<0.000000e+00> : vector<16x128xf32>
    %9 = tpu.matmul %6, %3, %cst {dimension_numbers = #tpu.dot_dimension_numbers<[1], [0], [0], [1], [0, 0, 1, 1], [], []>} : vector<16x64xbf16>, vector<64x128xbf16>, vector<16x128xf32> -> vector<16x128xf32>
    %cst_8 = arith.constant dense<0.000000e+00> : vector<16x128xf32>
    %10 = tpu.matmul %8, %4, %cst_8 {dimension_numbers = #tpu.dot_dimension_numbers<[1], [0], [0], [1], [0, 0, 1, 1], [], []>} : vector<16x64xbf16>, vector<64x128xbf16>, vector<16x128xf32> -> vector<16x128xf32>
    %cst_9 = arith.constant dense<0.000000e+00> : vector<16x128xf32>
    %11 = tpu.matmul %6, %4, %cst_9 {dimension_numbers = #tpu.dot_dimension_numbers<[1], [0], [0], [1], [0, 0, 1, 1], [], []>} : vector<16x64xbf16>, vector<64x128xbf16>, vector<16x128xf32> -> vector<16x128xf32>
    %cst_10 = arith.constant dense<0.000000e+00> : vector<16x128xf32>
    %12 = tpu.matmul %8, %3, %cst_10 {dimension_numbers = #tpu.dot_dimension_numbers<[1], [0], [0], [1], [0, 0, 1, 1], [], []>} : vector<16x64xbf16>, vector<64x128xbf16>, vector<16x128xf32> -> vector<16x128xf32>
    %13 = arith.subf %9, %10 : vector<16x128xf32>
    %c0_11 = arith.constant 0 : index
    %c0_12 = arith.constant 0 : index
    %14 = vector.load %arg6[%c0_11, %c0_12] : memref<16x128xf32, #tpu.memory_space<vmem>>, vector<16x128xf32>
    tpu.vector_store %arg6[%c0_11, %c0_12], %13 {strides = array<i32>} : memref<16x128xf32, #tpu.memory_space<vmem>>, vector<16x128xf32>,
    %15 = arith.addf %11, %12 : vector<16x128xf32>
    %c0_13 = arith.constant 0 : index
    %c0_14 = arith.constant 0 : index
    %16 = vector.load %arg7[%c0_13, %c0_14] : memref<16x128xf32, #tpu.memory_space<vmem>>, vector<16x128xf32>
    tpu.vector_store %arg7[%c0_13, %c0_14], %15 {strides = array<i32>} : memref<16x128xf32, #tpu.memory_space<vmem>>, vector<16x128xf32>,
    return
  }
  func.func @transform_0(%arg0: i32, %arg1: i32) -> (i32, i32) {
    %c0_i32 = arith.constant 0 : i32
    %c0_i32_0 = arith.constant 0 : i32
    return %arg1, %c0_i32 : i32, i32
  }
  func.func @transform_1(%arg0: i32, %arg1: i32) -> (i32, i32) {
    %c0_i32 = arith.constant 0 : i32
    %c0_i32_0 = arith.constant 0 : i32
    return %arg1, %c0_i32 : i32, i32
  }
  func.func @transform_2(%arg0: i32, %arg1: i32) -> (i32, i32) {
    %c0_i32 = arith.constant 0 : i32
    %c0_i32_0 = arith.constant 0 : i32
    return %c0_i32, %arg0 : i32, i32
  }
  func.func @transform_3(%arg0: i32, %arg1: i32) -> (i32, i32) {
    %c0_i32 = arith.constant 0 : i32
    %c0_i32_0 = arith.constant 0 : i32
    return %c0_i32, %arg0 : i32, i32
  }
  func.func @transform_4(%arg0: i32, %arg1: i32) -> (i32, i32) {
    %c0_i32 = arith.constant 0 : i32
    return %arg1, %arg0 : i32, i32
  }
  func.func @transform_5(%arg0: i32, %arg1: i32) -> (i32, i32) {
    %c0_i32 = arith.constant 0 : i32
    return %arg1, %arg0 : i32, i32
  }
}

</mosaic_0001>

<llo_original>
// kernel: tpu_custom_call.1
$region0: #{tpu_custom_call.1}
  #allocation0 [shape = 'u32[]', space=smem, size = 0x4, offset = 0x4, fixed_abs, tag = 'smem constant byte address 0x4 - core index']
  #allocation1 [shape = 'u32[144,128]{1,0:T(1,128)}', space=vmem, size = 0x12000, scoped, tag = 'internal scratch']
  #allocation2 [shape = 'bf16[64,128]{1,0:T(8,128)(2,1)}', space=vmem, size = 0x4000, scoped, tag = 'scratch operand']
  #allocation3 [shape = 'bf16[64,128]{1,0:T(8,128)(2,1)}', space=vmem, size = 0x4000, scoped, tag = 'scratch operand']
  %s0 = inlined_call_operand.hbm [shape: f32[16,64], index: 0, kind: input, shape index: {}]
  %s1 = inlined_call_operand.hbm [shape: f32[16,64], index: 1, kind: input, shape index: {}]
  %s2 = inlined_call_operand.hbm [shape: f32[64,128], index: 2, kind: input, shape index: {}]
  %s3 = inlined_call_operand.hbm [shape: f32[64,128], index: 3, kind: input, shape index: {}]
  %s4 = inlined_call_operand.hbm [shape: f32[16,128], index: 4, kind: output, shape index: {0}]
  %s5 = inlined_call_operand.hbm [shape: f32[16,128], index: 5, kind: output, shape index: {1}]
  %6 = xla_tuple %s4, %s5
  %s7 = sld [smem:[#allocation0]]
  $region54: #{tpu_custom_call.1} parent=0
    _
  %s9 = ssub.s32 1, %s7
  %s10 = scalar_select 0, %s9, %s7
  $region1: #{tpu_custom_call.1} parent=0
    #allocation4 [shape = 'u8[8192]{0}', space=vmem, size = 0x2000, scoped, tag = 'input window, operand 0, single buffered']
    #allocation5 [shape = 's32[1]{0}', space=sflag, size = 0x4, scoped, tag = 'scoped memory for tpu_custom_call.1']
    #allocation6 [shape = 's32[1]{0}', space=sflag, size = 0x4, scoped, tag = 'scoped memory for tpu_custom_call.1']
    #allocation7 [shape = 'u8[8192]{0}', space=vmem, size = 0x2000, scoped, tag = 'input window, operand 1, single buffered']
    #allocation8 [shape = 's32[1]{0}', space=sflag, size = 0x4, scoped, tag = 'scoped memory for tpu_custom_call.1']
    #allocation9 [shape = 'u8[32768]{0}', space=vmem, size = 0x8000, scoped, tag = 'input window, operand 2, single buffered']
    #allocation10 [shape = 'u8[32768]{0}', space=vmem, size = 0x8000, scoped, tag = 'input window, operand 3, single buffered']
    #allocation11 [shape = 's32[1]{0}', space=sflag, size = 0x4, scoped, tag = 'scoped memory for tpu_custom_call.1']
    #allocation12 [shape = 'u8[8192]{0}', space=vmem, size = 0x2000, scoped, tag = 'output window, operand 0, single buffered']
    #allocation13 [shape = 'u8[8192]{0}', space=vmem, size = 0x2000, scoped, tag = 'output window, operand 1, single buffered']
    #allocation14 [shape = 's32[1]{0}', space=sflag, size = 0x4, scoped, tag = 'scoped memory for tpu_custom_call.1']
    %11 = vsyncpa [#allocation5], 0
    %12 = vsyncpa [#allocation8], 0
    %13 = vsyncpa [#allocation11], 0
    %14 = vsyncpa [#allocation6], 0
    %15 = vsyncpa [#allocation14], 0
    // Predicated region
    $region2: #{tpu_custom_call.1} parent=1 // pred_check
      _
    $region3: #{tpu_custom_call.1} parent=1 // pred_check_branch
      %17 = sbr.rel (0) target = $region5
    $region4: #{tpu_custom_call.1} parent=1 // pred_region
      %s19 = ssub.s32 256, 256
      %20 = vsyncadd [#allocation5], %s19
      %s21 = sshll.u32 [#allocation4], 4
      %s22 = int_to_ptr.vmem [resolvable:$true] %s21
      %27 = dma.hbm_to_vmem [thread:$0]  %s0, 256, %s22, [#allocation5], 128, 128, 8
    $region5: #{tpu_custom_call.1} parent=1 // pred_fallthru
      _
    // Predicated region
    $region6: #{tpu_custom_call.1} parent=1 // pred_check
      _
    $region7: #{tpu_custom_call.1} parent=1 // pred_check_branch
      %29 = sbr.rel (0) target = $region9
    $region8: #{tpu_custom_call.1} parent=1 // pred_region
      %s31 = ssub.s32 256, 256
      %32 = vsyncadd [#allocation8], %s31
      %s33 = sshll.u32 [#allocation7], 4
      %s34 = int_to_ptr.vmem [resolvable:$true] %s33
      %39 = dma.hbm_to_vmem [thread:$0]  %s1, 256, %s34, [#allocation8], 128, 128, 8
    $region9: #{tpu_custom_call.1} parent=1 // pred_fallthru
      _
    // Predicated region
    $region10: #{tpu_custom_call.1} parent=1 // pred_check
      _
    $region11: #{tpu_custom_call.1} parent=1 // pred_check_branch
      %41 = sbr.rel (0) target = $region13
    $region12: #{tpu_custom_call.1} parent=1 // pred_region
      %s43 = ssub.s32 1024, 1024
      %44 = vsyncadd [#allocation8], %s43
      %s45 = sshll.u32 [#allocation9], 4
      %s46 = int_to_ptr.vmem [resolvable:$true] %s45
      %51 = dma.hbm_to_vmem [thread:$0]  %s2, 1024, %s46, [#allocation8], 128, 128, 8
    $region13: #{tpu_custom_call.1} parent=1 // pred_fallthru
      _
    // Predicated region
    $region14: #{tpu_custom_call.1} parent=1 // pred_check
      _
    $region15: #{tpu_custom_call.1} parent=1 // pred_check_branch
      %53 = sbr.rel (0) target = $region17
    $region16: #{tpu_custom_call.1} parent=1 // pred_region
      %s55 = ssub.s32 1024, 1024
      %56 = vsyncadd [#allocation11], %s55
      %s57 = sshll.u32 [#allocation10], 4
      %s58 = int_to_ptr.vmem [resolvable:$true] %s57
      %63 = dma.hbm_to_vmem [thread:$0]  %s3, 1024, %s58, [#allocation11], 128, 128, 8
    $region17: #{tpu_custom_call.1} parent=1 // pred_fallthru
      _
    // Predicated region
    $region18: #{tpu_custom_call.1} parent=1 // pred_check
      _
    $region19: #{tpu_custom_call.1} parent=1 // pred_check_branch
      %65 = sbr.rel (0) target = $region21
    $region20: #{tpu_custom_call.1} parent=1 // pred_region
      %66 = dma.done [#allocation5], 256
    $region21: #{tpu_custom_call.1} parent=1 // pred_fallthru
      _
    // Predicated region
    $region22: #{tpu_custom_call.1} parent=1 // pred_check
      _
    $region23: #{tpu_custom_call.1} parent=1 // pred_check_branch
      %68 = sbr.rel (0) target = $region25
    $region24: #{tpu_custom_call.1} parent=1 // pred_region
      %69 = dma.done [#allocation8], 256
    $region25: #{tpu_custom_call.1} parent=1 // pred_fallthru
      _
    // Predicated region
    $region26: #{tpu_custom_call.1} parent=1 // pred_check
      _
    $region27: #{tpu_custom_call.1} parent=1 // pred_check_branch
      %71 = sbr.rel (0) target = $region29
    $region28: #{tpu_custom_call.1} parent=1 // pred_region
      %72 = dma.done [#allocation8], 1024
    $region29: #{tpu_custom_call.1} parent=1 // pred_fallthru
      _
    // Predicated region
    $region30: #{tpu_custom_call.1} parent=1 // pred_check
      _
    $region31: #{tpu_custom_call.1} parent=1 // pred_check_branch
      %74 = sbr.rel (0) target = $region33
    $region32: #{tpu_custom_call.1} parent=1 // pred_region
      %75 = dma.done [#allocation11], 1024
    $region33: #{tpu_custom_call.1} parent=1 // pred_fallthru
      _
    %p77 = scmp.eq.s32.totalorder 0, 0
    // Predicated region
    $region34: #{tpu_custom_call.1} parent=1 // pred_check
      %p78 = pneg %p77
    $region35: #{tpu_custom_call.1} parent=1 // pred_check_branch
      %80 = sbr.rel (%p78) target = $region37
    $region36: #{tpu_custom_call.1} parent=1 // pred_region
      %v81 = vld [vmem:[#allocation9] sm:$0xff]
      %v82 = vld [vmem:[#allocation9 + $0x8] sm:$0xff]
      %v83 = vld [vmem:[#allocation9 + $0x10] sm:$0xff]
      %v84 = vld [vmem:[#allocation9 + $0x18] sm:$0xff]
      %v85 = vld [vmem:[#allocation9 + $0x20] sm:$0xff]
      %v86 = vld [vmem:[#allocation9 + $0x28] sm:$0xff]
      %v87 = vld [vmem:[#allocation9 + $0x30] sm:$0xff]
      %v88 = vld [vmem:[#allocation9 + $0x38] sm:$0xff]
      %v89 = vld [vmem:[#allocation10] sm:$0xff]
      %v90 = vld [vmem:[#allocation10 + $0x8] sm:$0xff]
      %v91 = vld [vmem:[#allocation10 + $0x10] sm:$0xff]
      %v92 = vld [vmem:[#allocation10 + $0x18] sm:$0xff]
      %v93 = vld [vmem:[#allocation10 + $0x20] sm:$0xff]
      %v94 = vld [vmem:[#allocation10 + $0x28] sm:$0xff]
      %v95 = vld [vmem:[#allocation10 + $0x30] sm:$0xff]
      %v96 = vld [vmem:[#allocation10 + $0x38] sm:$0xff]
      %v97 = vmul.f32 %v81, %v81
      %v98 = vmul.f32 %v82, %v82
      %v99 = vmul.f32 %v83, %v83
      %v100 = vmul.f32 %v84, %v84
      %v101 = vmul.f32 %v85, %v85
      %v102 = vmul.f32 %v86, %v86
      %v103 = vmul.f32 %v87, %v87
      %v104 = vmul.f32 %v88, %v88
      %v105 = vmul.f32 %v89, %v89
      %v106 = vmul.f32 %v90, %v90
      %v107 = vmul.f32 %v91, %v91
      %v108 = vmul.f32 %v92, %v92
      %v109 = vmul.f32 %v93, %v93
      %v110 = vmul.f32 %v94, %v94
      %v111 = vmul.f32 %v95, %v95
      %v112 = vmul.f32 %v96, %v96
      %v113 = vadd.f32 %v97, %v105
      %v114 = vadd.f32 %v98, %v106
      %v115 = vadd.f32 %v99, %v107
      %v116 = vadd.f32 %v100, %v108
      %v117 = vadd.f32 %v101, %v109
      %v118 = vadd.f32 %v102, %v110
      %v119 = vadd.f32 %v103, %v111
      %v120 = vadd.f32 %v104, %v112
      %v121 = vrsqrt.pop %v113
      %v122 = vrsqrt.pop %v114
      %v123 = vrsqrt.pop %v115
      %v124 = vrsqrt.pop %v116
      %v125 = vrsqrt.pop %v117
      %v126 = vrsqrt.pop %v118
      %v127 = vrsqrt.pop %v119
      %v128 = vrsqrt.pop %v120
      %v129 = vmul.f32 %v121, 0.125
      %v130 = vmul.f32 %v122, 0.125
      %v131 = vmul.f32 %v123, 0.125
      %v132 = vmul.f32 %v124, 0.125
      %v133 = vmul.f32 %v125, 0.125
      %v134 = vmul.f32 %v126, 0.125
      %v135 = vmul.f32 %v127, 0.125
      %v136 = vmul.f32 %v128, 0.125
      %v137 = vmul.f32 %v81, %v129
      %v138 = vmul.f32 %v82, %v130
      %v139 = vmul.f32 %v83, %v131
      %v140 = vmul.f32 %v84, %v132
      %v141 = vmul.f32 %v85, %v133
      %v142 = vmul.f32 %v86, %v134
      %v143 = vmul.f32 %v87, %v135
      %v144 = vmul.f32 %v88, %v136
      %v145 = vpack.c.bf16 %v138, %v137
      %v146 = vpack.c.bf16 %v140, %v139
      %v147 = vpack.c.bf16 %v142, %v141
      %v148 = vpack.c.bf16 %v144, %v143
      %v153 = vunpack.c.l.b16 %v145
      %v154 = vunpack.c.h.b16 %v145
      %v155 = vunpack.c.l.b16 %v146
      %v156 = vunpack.c.h.b16 %v146
      %v157 = vunpack.c.l.b16 %v147
      %v158 = vunpack.c.h.b16 %v147
      %v159 = vunpack.c.l.b16 %v148
      %v160 = vunpack.c.h.b16 %v148
      %v161 = vpack.c.b16 %v153, %v153
      %v162 = vpack.c.b16 %v154, %v154
      %v163 = vpack.c.b16 %v155, %v155
      %v164 = vpack.c.b16 %v156, %v156
      %v165 = vpack.c.b16 %v157, %v157
      %v166 = vpack.c.b16 %v158, %v158
      %v167 = vpack.c.b16 %v159, %v159
      %v168 = vpack.c.b16 %v160, %v160
      %177 = vst [vmem:[#allocation2] sm:$0xf] %v161
      %178 = vst [vmem:[#allocation2 + $0x4] sm:$0xf] %v162
      %179 = vst [vmem:[#allocation2 + $0x8] sm:$0xf] %v163
      %180 = vst [vmem:[#allocation2 + $0xc] sm:$0xf] %v164
      %181 = vst [vmem:[#allocation2 + $0x10] sm:$0xf] %v165
      %182 = vst [vmem:[#allocation2 + $0x14] sm:$0xf] %v166
      %183 = vst [vmem:[#allocation2 + $0x18] sm:$0xf] %v167
      %184 = vst [vmem:[#allocation2 + $0x1c] sm:$0xf] %v168
      %v185 = vmul.f32 %v89, %v129
      %v186 = vmul.f32 %v90, %v130
      %v187 = vmul.f32 %v91, %v131
      %v188 = vmul.f32 %v92, %v132
      %v189 = vmul.f32 %v93, %v133
      %v190 = vmul.f32 %v94, %v134
      %v191 = vmul.f32 %v95, %v135
      %v192 = vmul.f32 %v96, %v136
      %v193 = vpack.c.bf16 %v186, %v185
      %v194 = vpack.c.bf16 %v188, %v187
      %v195 = vpack.c.bf16 %v190, %v189
      %v196 = vpack.c.bf16 %v192, %v191
      %v201 = vunpack.c.l.b16 %v193
      %v202 = vunpack.c.h.b16 %v193
      %v203 = vunpack.c.l.b16 %v194
      %v204 = vunpack.c.h.b16 %v194
      %v205 = vunpack.c.l.b16 %v195
      %v206 = vunpack.c.h.b16 %v195
      %v207 = vunpack.c.l.b16 %v196
      %v208 = vunpack.c.h.b16 %v196
      %v209 = vpack.c.b16 %v201, %v201
      %v210 = vpack.c.b16 %v202, %v202
      %v211 = vpack.c.b16 %v203, %v203
      %v212 = vpack.c.b16 %v204, %v204
      %v213 = vpack.c.b16 %v205, %v205
      %v214 = vpack.c.b16 %v206, %v206
      %v215 = vpack.c.b16 %v207, %v207
      %v216 = vpack.c.b16 %v208, %v208
      %225 = vst [vmem:[#allocation3] sm:$0xf] %v209
      %226 = vst [vmem:[#allocation3 + $0x4] sm:$0xf] %v210
      %227 = vst [vmem:[#allocation3 + $0x8] sm:$0xf] %v211
      %228 = vst [vmem:[#allocation3 + $0xc] sm:$0xf] %v212
      %229 = vst [vmem:[#allocation3 + $0x10] sm:$0xf] %v213
      %230 = vst [vmem:[#allocation3 + $0x14] sm:$0xf] %v214
      %231 = vst [vmem:[#allocation3 + $0x18] sm:$0xf] %v215
      %232 = vst [vmem:[#allocation3 + $0x1c] sm:$0xf] %v216
    $region37: #{tpu_custom_call.1} parent=1 // pred_fallthru
      _
    %v233 = vld [vmem:[#allocation2] sm:$0xf]
    %v234 = vld [vmem:[#allocation2 + $0x4] sm:$0xf]
    %v235 = vld [vmem:[#allocation2 + $0x8] sm:$0xf]
    %v236 = vld [vmem:[#allocation2 + $0xc] sm:$0xf]
    %v237 = vld [vmem:[#allocation2 + $0x10] sm:$0xf]
    %v238 = vld [vmem:[#allocation2 + $0x14] sm:$0xf]
    %v239 = vld [vmem:[#allocation2 + $0x18] sm:$0xf]
    %v240 = vld [vmem:[#allocation2 + $0x1c] sm:$0xf]
    %v241 = vld [vmem:[#allocation3] sm:$0xf]
    %v242 = vld [vmem:[#allocation3 + $0x4] sm:$0xf]
    %v243 = vld [vmem:[#allocation3 + $0x8] sm:$0xf]
    %v244 = vld [vmem:[#allocation3 + $0xc] sm:$0xf]
    %v245 = vld [vmem:[#allocation3 + $0x10] sm:$0xf]
    %v246 = vld [vmem:[#allocation3 + $0x14] sm:$0xf]
    %v247 = vld [vmem:[#allocation3 + $0x18] sm:$0xf]
    %v248 = vld [vmem:[#allocation3 + $0x1c] sm:$0xf]
    %v249 = vld [vmem:[#allocation4] sm:$0xff]
    %v250 = vld [vmem:[#allocation4 + $0x8] sm:$0xff]
    %v251 = vpack.c.bf16 %v250, %v249
    %v252 = vld [vmem:[#allocation7] sm:$0xff]
    %v253 = vld [vmem:[#allocation7 + $0x8] sm:$0xff]
    %v254 = vpack.c.bf16 %v253, %v252
    %v263 = vunpack.c.l.b16 %v233
    %v264 = vunpack.c.l.b16 %v234
    %v265 = vunpack.c.l.b16 %v235
    %v266 = vunpack.c.l.b16 %v236
    %v267 = vunpack.c.l.b16 %v237
    %v268 = vunpack.c.l.b16 %v238
    %v269 = vunpack.c.l.b16 %v239
    %v270 = vunpack.c.l.b16 %v240
    %v271 = vpack.c.b16 %v264, %v263
    %v272 = vpack.c.b16 %v266, %v265
    %v273 = vpack.c.b16 %v268, %v267
    %v274 = vpack.c.b16 %v270, %v269
    %vm279 = vcmask 523264
    %v281 = vsel %vm279, %v251, 0
    %283 = vmatprep.subr.bf16.mxu0 0
    %284 = vmatpush1.bf16.msra.mxu0 0
    %285 = vmatprep.subr.bf16.mxu0 0
    %286 = vmatpush1.bf16.msra.mxu0 0
    %287 = vmatprep.subr.bf16.mxu0 0
    %288 = vmatpush1.bf16.msra.mxu0 0
    %289 = vmatprep.subr.bf16.mxu0 0
    %290 = vmatpush1.bf16.msra.mxu0 0
    %291 = vmatprep.subr.bf16.mxu0 0
    %292 = vmatpush1.bf16.msra.mxu0 %v274
    %293 = vmatprep.subr.bf16.mxu0 0
    %294 = vmatpush1.bf16.msra.mxu0 %v273
    %295 = vmatprep.subr.bf16.mxu0 0
    %296 = vmatpush1.bf16.msra.mxu0 %v272
    %297 = vmatprep.subr.bf16.mxu0 0
    %298 = vmatpush1.bf16.msra.mxu0 %v271
    %299 = vmatprep.subr.bf16.mxu0 0
    %300 = vmatpush2.bf16.msra.mxu0 0
    %301 = vmatprep.subr.bf16.mxu0 0
    %302 = vmatpush2.bf16.msra.mxu0 0
    %303 = vmatprep.subr.bf16.mxu0 0
    %304 = vmatpush2.bf16.msra.mxu0 0
    %305 = vmatprep.subr.bf16.mxu0 0
    %306 = vmatpush2.bf16.msra.mxu0 0
    %307 = vmatprep.subr.bf16.mxu0 0
    %308 = vmatpush2.bf16.msra.mxu0 0
    %309 = vmatprep.subr.bf16.mxu0 0
    %310 = vmatpush2.bf16.msra.mxu0 0
    %311 = vmatprep.subr.bf16.mxu0 0
    %312 = vmatpush2.bf16.msra.mxu0 0
    %313 = vmatprep.subr.bf16.mxu0 0
    %314 = vmatpush2.bf16.msra.mxu0 0
    %315 = vmatprep.mubr.bf16.mxu0 0
    %316 = vmatmul.mubr.bf16.gmra.mxu0 %v281
    %v317 = vpop.f32.mrf.mxu0
    %v318 = vadd.f32 0.0, %v317
    %v319 = vpop.f32.mrf.mxu0
    %v320 = vpop.f32.mrf.mxu0
    %v321 = vadd.f32 0.0, %v320
    %v322 = vpop.f32.mrf.mxu0
    %323 = vdwg.mxu0
    %v332 = vunpack.c.l.b16 %v241
    %v333 = vunpack.c.l.b16 %v242
    %v334 = vunpack.c.l.b16 %v243
    %v335 = vunpack.c.l.b16 %v244
    %v336 = vunpack.c.l.b16 %v245
    %v337 = vunpack.c.l.b16 %v246
    %v338 = vunpack.c.l.b16 %v247
    %v339 = vunpack.c.l.b16 %v248
    %v340 = vpack.c.b16 %v333, %v332
    %v341 = vpack.c.b16 %v335, %v334
    %v342 = vpack.c.b16 %v337, %v336
    %v343 = vpack.c.b16 %v339, %v338
    %v349 = vsel %vm279, %v254, 0
    %351 = vmatprep.subr.bf16.mxu0 0
    %352 = vmatpush1.bf16.msra.mxu0 0
    %353 = vmatprep.subr.bf16.mxu0 0
    %354 = vmatpush1.bf16.msra.mxu0 0
    %355 = vmatprep.subr.bf16.mxu0 0
    %356 = vmatpush1.bf16.msra.mxu0 0
    %357 = vmatprep.subr.bf16.mxu0 0
    %358 = vmatpush1.bf16.msra.mxu0 0
    %359 = vmatprep.subr.bf16.mxu0 0
    %360 = vmatpush1.bf16.msra.mxu0 %v343
    %361 = vmatprep.subr.bf16.mxu0 0
    %362 = vmatpush1.bf16.msra.mxu0 %v342
    %363 = vmatprep.subr.bf16.mxu0 0
    %364 = vmatpush1.bf16.msra.mxu0 %v341
    %365 = vmatprep.subr.bf16.mxu0 0
    %366 = vmatpush1.bf16.msra.mxu0 %v340
    %367 = vmatprep.subr.bf16.mxu0 0
    %368 = vmatpush2.bf16.msra.mxu0 0
    %369 = vmatprep.subr.bf16.mxu0 0
    %370 = vmatpush2.bf16.msra.mxu0 0
    %371 = vmatprep.subr.bf16.mxu0 0
    %372 = vmatpush2.bf16.msra.mxu0 0
    %373 = vmatprep.subr.bf16.mxu0 0
    %374 = vmatpush2.bf16.msra.mxu0 0
    %375 = vmatprep.subr.bf16.mxu0 0
    %376 = vmatpush2.bf16.msra.mxu0 0
    %377 = vmatprep.subr.bf16.mxu0 0
    %378 = vmatpush2.bf16.msra.mxu0 0
    %379 = vmatprep.subr.bf16.mxu0 0
    %380 = vmatpush2.bf16.msra.mxu0 0
    %381 = vmatprep.subr.bf16.mxu0 0
    %382 = vmatpush2.bf16.msra.mxu0 0
    %383 = vmatprep.mubr.bf16.mxu0 0
    %384 = vmatmul.mubr.bf16.gmra.mxu0 %v349
    %v385 = vpop.f32.mrf.mxu0
    %v386 = vadd.f32 0.0, %v385
    %v387 = vpop.f32.mrf.mxu0
    %v388 = vpop.f32.mrf.mxu0
    %v389 = vadd.f32 0.0, %v388
    %v390 = vpop.f32.mrf.mxu0
    %391 = vdwg.mxu0
    %392 = vmatprep.subr.bf16.mxu0 0
    %393 = vmatpush1.bf16.msra.mxu0 0
    %394 = vmatprep.subr.bf16.mxu0 0
    %395 = vmatpush1.bf16.msra.mxu0 0
    %396 = vmatprep.subr.bf16.mxu0 0
    %397 = vmatpush1.bf16.msra.mxu0 0
    %398 = vmatprep.subr.bf16.mxu0 0
    %399 = vmatpush1.bf16.msra.mxu0 0
    %400 = vmatprep.subr.bf16.mxu0 0
    %401 = vmatpush1.bf16.msra.mxu0 %v274
    %402 = vmatprep.subr.bf16.mxu0 0
    %403 = vmatpush1.bf16.msra.mxu0 %v273
    %404 = vmatprep.subr.bf16.mxu0 0
    %405 = vmatpush1.bf16.msra.mxu0 %v272
    %406 = vmatprep.subr.bf16.mxu0 0
    %407 = vmatpush1.bf16.msra.mxu0 %v271
    %408 = vmatprep.subr.bf16.mxu0 0
    %409 = vmatpush2.bf16.msra.mxu0 0
    %410 = vmatprep.subr.bf16.mxu0 0
    %411 = vmatpush2.bf16.msra.mxu0 0
    %412 = vmatprep.subr.bf16.mxu0 0
    %413 = vmatpush2.bf16.msra.mxu0 0
    %414 = vmatprep.subr.bf16.mxu0 0
    %415 = vmatpush2.bf16.msra.mxu0 0
    %416 = vmatprep.subr.bf16.mxu0 0
    %417 = vmatpush2.bf16.msra.mxu0 0
    %418 = vmatprep.subr.bf16.mxu0 0
    %419 = vmatpush2.bf16.msra.mxu0 0
    %420 = vmatprep.subr.bf16.mxu0 0
    %421 = vmatpush2.bf16.msra.mxu0 0
    %422 = vmatprep.subr.bf16.mxu0 0
    %423 = vmatpush2.bf16.msra.mxu0 0
    %424 = vmatprep.mubr.bf16.mxu0 0
    %425 = vmatmul.mubr.bf16.gmra.mxu0 %v349
    %v426 = vpop.f32.mrf.mxu0
    %v427 = vadd.f32 0.0, %v426
    %v428 = vpop.f32.mrf.mxu0
    %v429 = vpop.f32.mrf.mxu0
    %v430 = vadd.f32 0.0, %v429
    %v431 = vpop.f32.mrf.mxu0
    %432 = vdwg.mxu0
    %v433 = vsub.f32 %v318, %v386
    %v434 = vsub.f32 %v321, %v389
    %435 = vst [vmem:[#allocation12] sm:$0xff] %v433
    %436 = vst [vmem:[#allocation12 + $0x8] sm:$0xff] %v434
    %437 = vmatprep.subr.bf16.mxu0 0
    %438 = vmatpush1.bf16.msra.mxu0 0
    %439 = vmatprep.subr.bf16.mxu0 0
    %440 = vmatpush1.bf16.msra.mxu0 0
    %441 = vmatprep.subr.bf16.mxu0 0
    %442 = vmatpush1.bf16.msra.mxu0 0
    %443 = vmatprep.subr.bf16.mxu0 0
    %444 = vmatpush1.bf16.msra.mxu0 0
    %445 = vmatprep.subr.bf16.mxu0 0
    %446 = vmatpush1.bf16.msra.mxu0 %v343
    %447 = vmatprep.subr.bf16.mxu0 0
    %448 = vmatpush1.bf16.msra.mxu0 %v342
    %449 = vmatprep.subr.bf16.mxu0 0
    %450 = vmatpush1.bf16.msra.mxu0 %v341
    %451 = vmatprep.subr.bf16.mxu0 0
    %452 = vmatpush1.bf16.msra.mxu0 %v340
    %453 = vmatprep.subr.bf16.mxu0 0
    %454 = vmatpush2.bf16.msra.mxu0 0
    %455 = vmatprep.subr.bf16.mxu0 0
    %456 = vmatpush2.bf16.msra.mxu0 0
    %457 = vmatprep.subr.bf16.mxu0 0
    %458 = vmatpush2.bf16.msra.mxu0 0
    %459 = vmatprep.subr.bf16.mxu0 0
    %460 = vmatpush2.bf16.msra.mxu0 0
    %461 = vmatprep.subr.bf16.mxu0 0
    %462 = vmatpush2.bf16.msra.mxu0 0
    %463 = vmatprep.subr.bf16.mxu0 0
    %464 = vmatpush2.bf16.msra.mxu0 0
    %465 = vmatprep.subr.bf16.mxu0 0
    %466 = vmatpush2.bf16.msra.mxu0 0
    %467 = vmatprep.subr.bf16.mxu0 0
    %468 = vmatpush2.bf16.msra.mxu0 0
    %469 = vmatprep.mubr.bf16.mxu0 0
    %470 = vmatmul.mubr.bf16.gmra.mxu0 %v281
    %v471 = vpop.f32.mrf.mxu0
    %v472 = vadd.f32 %v427, %v471
    %v473 = vpop.f32.mrf.mxu0
    %v474 = vpop.f32.mrf.mxu0
    %v475 = vadd.f32 %v430, %v474
    %v476 = vpop.f32.mrf.mxu0
    %477 = vdwg.mxu0
    %478 = vst [vmem:[#allocation13] sm:$0xff] %v472
    %479 = vst [vmem:[#allocation13 + $0x8] sm:$0xff] %v475
    // Predicated region
    $region38: #{tpu_custom_call.1} parent=1 // pred_check
      _
    $region39: #{tpu_custom_call.1} parent=1 // pred_check_branch
      %481 = sbr.rel (0) target = $region41
    $region40: #{tpu_custom_call.1} parent=1 // pred_region
      %s483 = ssub.s32 256, 256
      %484 = vsyncadd [#allocation6], %s483
      %s485 = sshll.u32 [#allocation12], 4
      %s486 = int_to_ptr.vmem [resolvable:$true] %s485
      %491 = dma.vmem_to_hbm [thread:$0]  %s486, 256, %s4, [#allocation6], 128, 128, 8
    $region41: #{tpu_custom_call.1} parent=1 // pred_fallthru
      _
    // Predicated region
    $region42: #{tpu_custom_call.1} parent=1 // pred_check
      _
    $region43: #{tpu_custom_call.1} parent=1 // pred_check_branch
      %493 = sbr.rel (0) target = $region45
    $region44: #{tpu_custom_call.1} parent=1 // pred_region
      %s495 = ssub.s32 256, 256
      %496 = vsyncadd [#allocation14], %s495
      %s497 = sshll.u32 [#allocation13], 4
      %s498 = int_to_ptr.vmem [resolvable:$true] %s497
      %503 = dma.vmem_to_hbm [thread:$0]  %s498, 256, %s5, [#allocation14], 128, 128, 8
    $region45: #{tpu_custom_call.1} parent=1 // pred_fallthru
      _
    // Predicated region
    $region46: #{tpu_custom_call.1} parent=1 // pred_check
      _
    $region47: #{tpu_custom_call.1} parent=1 // pred_check_branch
      %505 = sbr.rel (0) target = $region49
    $region48: #{tpu_custom_call.1} parent=1 // pred_region
      %506 = dma.done [#allocation6], 256
    $region49: #{tpu_custom_call.1} parent=1 // pred_fallthru
      _
    // Predicated region
    $region50: #{tpu_custom_call.1} parent=1 // pred_check
      _
    $region51: #{tpu_custom_call.1} parent=1 // pred_check_branch
      %508 = sbr.rel (0) target = $region53
    $region52: #{tpu_custom_call.1} parent=1 // pred_region
      %509 = dma.done [#allocation14], 256
    $region53: #{tpu_custom_call.1} parent=1 // pred_fallthru
      _
    %510 = vsyncpa [#allocation5], 1
    %511 = vsyncpa [#allocation8], 1
    %512 = vsyncpa [#allocation11], 1
    %513 = vsyncpa [#allocation6], 1
    %514 = vsyncpa [#allocation14], 1

</llo_original>
